<compile_context>
chip_gen: v5e
topology: v5e:2x2
jax: 0.10.0
libtpu: 0.0.40
codegen_flags: <defaults>
</compile_context>

<pallas_src>
import jax
import jax.numpy as jnp
from jax.experimental import pallas as pl
from jax.experimental.pallas import tpu as pltpu

LANE = 128          # lane-dense width for all hidden / output feature dims
BATCH_ALIGN = 16    # covers f32 (8) and bf16 (16) sublane granularity
TB_TARGET = 512     # batch tile per grid step at large batch


def _round_up(n, m):
    return ((n + m - 1) // m) * m


def dqn_kernel(x_ref, w1_ref, wrest_ref, bias_ref, out_ref):
    """Fused 8-layer MLP: 7x (Linear + ReLU) followed by a final Linear.

    x_ref:     (TB, in_dim) f32 activation tile (narrow, unpadded feature dim)
    w1_ref:    (in_dim, D)  bf16 first-layer weight (fan_out zero-padded to D)
    wrest_ref: (7, D, D)    bf16 stacked weights for layers 2..8 (zero-padded)
    bias_ref:  (8, 1, D)    f32 stacked biases (zero-padded)
    out_ref:   (TB, D)      bf16 lane-dense output tile

    MXU matmuls take bf16 inputs with f32 accumulation; bias add and ReLU stay
    in f32; activations are cast to bf16 only at each matmul input.
    """
    n_rest = wrest_ref.shape[0]          # 7 stacked layers (2..8)

    # Layer 1: cast the narrow f32 input tile to bf16 at the matmul boundary.
    x = x_ref[...].astype(jnp.bfloat16)
    h = jnp.dot(x, w1_ref[...], preferred_element_type=jnp.float32) + bias_ref[0]
    h = jnp.maximum(h, 0.0).astype(jnp.bfloat16)

    # Layers 2..7: hidden Linear + ReLU (static unroll over the stacked slab).
    for l in range(n_rest - 1):
        h = jnp.dot(h, wrest_ref[l], preferred_element_type=jnp.float32) + bias_ref[l + 1]
        h = jnp.maximum(h, 0.0).astype(jnp.bfloat16)

    # Final layer: no activation; bf16 lane-dense (TB, D) store.
    out = jnp.dot(h, wrest_ref[n_rest - 1],
                  preferred_element_type=jnp.float32) + bias_ref[n_rest]
    out_ref[...] = out.astype(out_ref.dtype)


def pack_params(params):
    """Prepare the 8 (W, b) pairs for the kernel.

    Layer 1 keeps its true fan_in (so the input array is never lane-padded in
    HBM); every other feature dim is zero-padded to a common lane-dense width
    D (multiple of 128). Layers 2..8 are stacked into one (7, D, D) bf16
    array, all biases into one (8, 1, D) f32 array. Zero padding preserves
    the forward semantics exactly (padded weight rows/cols and biases are 0,
    ReLU(0) = 0, padded output columns are sliced off).
    """
    n_layers = len(params)
    in_dim = params[0][0].shape[0]

    # Common padded width for every hidden / output feature dim.
    dim_pad = LANE
    for w, _ in params:
        dim_pad = max(dim_pad, _round_up(w.shape[1], LANE))
    for w, _ in params[1:]:
        dim_pad = max(dim_pad, _round_up(w.shape[0], LANE))

    # First layer: (in_dim, D) bf16, fan_out padded only.
    w1, _ = params[0]
    w1_p = jnp.zeros((in_dim, dim_pad), jnp.float32).at[:, :w1.shape[1]].set(w1)
    w1_p = w1_p.astype(jnp.bfloat16)

    # Remaining layers stacked: (7, D, D) bf16.
    w_rest = jnp.zeros((n_layers - 1, dim_pad, dim_pad), jnp.float32)
    for i, (w, _) in enumerate(params[1:]):
        fi, fo = w.shape
        w_rest = w_rest.at[i, :fi, :fo].set(w)
    w_rest = w_rest.astype(jnp.bfloat16)

    # All biases stacked: (8, 1, D) f32 (bias add / ReLU remain in f32).
    b_all = jnp.zeros((n_layers, 1, dim_pad), jnp.float32)
    for i, (_, b) in enumerate(params):
        b_all = b_all.at[i, 0, :b.shape[-1]].set(b.reshape(-1))

    return {
        "w1": w1_p,
        "w_rest": w_rest,
        "b_all": b_all,
        "dim_pad": dim_pad,
        "in_dim": in_dim,
        "out_dim": params[-1][0].shape[1],
    }


def dqn_forward(x, packed):
    """x: (B, input_dim) f32. Returns (B, out_dim) f32 Q-values."""
    w1_p, w_rest, b_all = packed["w1"], packed["w_rest"], packed["b_all"]
    dim_pad, in_dim, out_dim = packed["dim_pad"], packed["in_dim"], packed["out_dim"]

    B = x.shape[0]
    assert x.shape[1] == in_dim

    # Batch tiling: one right-sized tile for small/medium batches (minimal
    # tail waste), TB_TARGET tiles streamed over a 1-D grid for big batches.
    if B <= TB_TARGET:
        tb = _round_up(max(B, BATCH_ALIGN), BATCH_ALIGN)
        b_pad = tb
    else:
        tb = TB_TARGET
        b_pad = _round_up(B, tb)
    grid = (b_pad // tb,)

    # Only pad batch rows; the feature dim stays at the true in_dim, so the
    # x stream is ~8x smaller than a 128-lane bf16 padded input.
    if b_pad != B:
        x_in = jnp.zeros((b_pad, in_dim), x.dtype).at[:B].set(x)
    else:
        x_in = x

    out_padded = pl.pallas_call(
        dqn_kernel,
        out_shape=jax.ShapeDtypeStruct((b_pad, dim_pad), jnp.bfloat16),
        grid=grid,
        in_specs=[
            # Activation tile: streamed (auto double-buffered) per grid step.
            # Last block dim == full array dim, so the narrow (tb, in_dim)
            # block is legal.
            pl.BlockSpec((tb, in_dim), lambda i: (i, 0)),
            # Weights / biases: full-extent blocks with constant index maps,
            # fetched once and kept VMEM-resident across all batch tiles.
            pl.BlockSpec(w1_p.shape, lambda i: (0, 0)),
            pl.BlockSpec(w_rest.shape, lambda i: (0, 0, 0)),
            pl.BlockSpec(b_all.shape, lambda i: (0, 0, 0)),
        ],
        out_specs=pl.BlockSpec((tb, dim_pad), lambda i: (i, 0)),
        compiler_params=pltpu.CompilerParams(
            # Batch tiles are independent. On v7x, pltpu.CORE_PARALLEL here
            # would shard tiles across both TensorCores; "parallel" is kept
            # for portability across v5e/v6e/v7x.
            dimension_semantics=("parallel",),
        ),
    )(x_in, w1_p, w_rest, b_all)

    # Slice off padding; callers that can consume the padded bf16 block
    # directly may skip this final slice/cast.
    return out_padded[:B, :out_dim].astype(jnp.float32)


def init_dqn_params(key, input_dim, hidden, output_dim):
    """Deterministic init mimicking torch.nn.Linear default (uniform +-1/sqrt(fan_in))."""
    dims = [
        (input_dim, hidden),       # linear1
        (hidden, hidden),          # linear2
        (hidden, hidden * 2),      # linear3
        (hidden * 2, hidden * 2),  # linear4
        (hidden * 2, hidden * 2),  # linear5
        (hidden * 2, hidden),      # linear6
        (hidden, hidden),          # linear7
        (hidden, output_dim),      # final
    ]
    params = []
    for (fan_in, fan_out) in dims:
        key, kw, kb = jax.random.split(key, 3)
        bound = 1.0 / jnp.sqrt(jnp.float32(fan_in))
        w = jax.random.uniform(kw, (fan_in, fan_out), jnp.float32, -bound, bound)
        b = jax.random.uniform(kb, (1, fan_out), jnp.float32, -bound, bound)
        params.append((w, b))
    return params


def dqn_reference(x, params):
    """Plain-JAX f32 reference for correctness checking."""
    h = x
    for w, b in params[:-1]:
        h = jnp.maximum(h @ w + b, 0.0)
    w, b = params[-1]
    return h @ w + b


if __name__ == "__main__":
    key = jax.random.PRNGKey(0)
    batch, input_dim, hidden, output_dim = 2, 16, 32, 4

    key, kx = jax.random.split(key)
    x = jax.random.normal(kx, (batch, input_dim), jnp.float32)

    params = init_dqn_params(key, input_dim, hidden, output_dim)
    packed = pack_params(params)   # pack/pad once; reused across calls

    # Small-shape check (matches the module's toy sizes).
    out = jax.block_until_ready(dqn_forward(x, packed))
    ref = dqn_reference(x, params)
    assert out.shape == (batch, output_dim)
    # bf16 matmuls (f32 accumulation) + bf16 output store -> loose tolerance.
    assert jnp.allclose(out, ref, atol=5e-2, rtol=5e-2), "mismatch vs reference (small batch)"

    # Medium, awkward batch: exercises the single right-sized tile path (304 rows).
    key, kx2 = jax.random.split(key)
    xb = jax.random.normal(kx2, (300, input_dim), jnp.float32)
    outb = jax.block_until_ready(dqn_forward(xb, packed))
    refb = dqn_reference(xb, params)
    assert outb.shape == (300, output_dim)
    assert jnp.allclose(outb, refb, atol=5e-2, rtol=5e-2), "mismatch vs reference (medium batch)"

    # Large batch: exercises the multi-tile streamed grid path (grid=(2,)).
    key, kx3 = jax.random.split(key)
    xc = jax.random.normal(kx3, (1000, input_dim), jnp.float32)
    outc = jax.block_until_ready(dqn_forward(xc, packed))
    refc = dqn_reference(xc, params)
    assert outc.shape == (1000, output_dim)
    assert jnp.allclose(outc, refc, atol=5e-2, rtol=5e-2), "mismatch vs reference (large batch)"

    print("KERNEL_OK")
</pallas_src>

<mosaic_0001>
module attributes {stable_mosaic.version = 11 : i64} {
  func.func @dqn_kernel(%arg0: i32, %arg1: memref<16x16xf32, #tpu.memory_space<vmem>>, %arg2: memref<16x128xbf16, #tpu.memory_space<vmem>>, %arg3: memref<7x128x128xbf16, #tpu.memory_space<vmem>>, %arg4: memref<8x1x128xf32, #tpu.memory_space<vmem>>, %arg5: memref<16x128xbf16, #tpu.memory_space<vmem>>) attributes {dimension_semantics = [#tpu.dimension_semantics<parallel>], iteration_bounds = array<i64: 1>, scalar_prefetch = 0 : i64, scratch_operands = 0 : i64, tpu.core_type = #tpu.core_type<tc>, window_params = [{transform_indices = @transform_0, window_bounds = array<i64: 16, 16>}, {pipeline_mode = #tpu.pipeline_mode<synchronous>, transform_indices = @transform_1, window_bounds = array<i64: 16, 128>}, {pipeline_mode = #tpu.pipeline_mode<synchronous>, transform_indices = @transform_2, window_bounds = array<i64: 7, 128, 128>}, {pipeline_mode = #tpu.pipeline_mode<synchronous>, transform_indices = @transform_3, window_bounds = array<i64: 8, 1, 128>}, {transform_indices = @transform_4, window_bounds = array<i64: 16, 128>}]} {
    %c0 = arith.constant 0 : index
    %c0_0 = arith.constant 0 : index
    %0 = vector.load %arg1[%c0, %c0_0] : memref<16x16xf32, #tpu.memory_space<vmem>>, vector<16x16xf32>
    %1 = arith.truncf %0 : vector<16x16xf32> to vector<16x16xbf16>
    %c0_1 = arith.constant 0 : index
    %c0_2 = arith.constant 0 : index
    %2 = vector.load %arg2[%c0_1, %c0_2] : memref<16x128xbf16, #tpu.memory_space<vmem>>, vector<16x128xbf16>
    %cst = arith.constant dense<0.000000e+00> : vector<16x128xf32>
    %3 = tpu.matmul %1, %2, %cst {dimension_numbers = #tpu.dot_dimension_numbers<[1], [0], [0], [1], [0, 0, 1, 1], [], []>} : vector<16x16xbf16>, vector<16x128xbf16>, vector<16x128xf32> -> vector<16x128xf32>
    %c0_3 = arith.constant 0 : index
    %c0_4 = arith.constant 0 : index
    %c0_5 = arith.constant 0 : index
    %4 = vector.load %arg4[%c0_3, %c0_4, %c0_5] : memref<8x1x128xf32, #tpu.memory_space<vmem>>, vector<1x1x128xf32>
    %5 = vector.shape_cast %4 : vector<1x1x128xf32> to vector<1x128xf32>
    %6 = vector.broadcast %5 : vector<1x128xf32> to vector<16x128xf32>
    %7 = arith.addf %3, %6 : vector<16x128xf32>
    %cst_6 = arith.constant 0.000000e+00 : f32
    %8 = vector.broadcast %cst_6 : f32 to vector<16x128xf32>
    %9 = arith.maximumf %7, %8 : vector<16x128xf32>
    %10 = arith.truncf %9 : vector<16x128xf32> to vector<16x128xbf16>
    %c0_7 = arith.constant 0 : index
    %c0_8 = arith.constant 0 : index
    %c0_9 = arith.constant 0 : index
    %11 = vector.load %arg3[%c0_7, %c0_8, %c0_9] : memref<7x128x128xbf16, #tpu.memory_space<vmem>>, vector<1x128x128xbf16>
    %12 = vector.shape_cast %11 : vector<1x128x128xbf16> to vector<128x128xbf16>
    %cst_10 = arith.constant dense<0.000000e+00> : vector<16x128xf32>
    %13 = tpu.matmul %10, %12, %cst_10 {dimension_numbers = #tpu.dot_dimension_numbers<[1], [0], [0], [1], [0, 0, 1, 1], [], []>} : vector<16x128xbf16>, vector<128x128xbf16>, vector<16x128xf32> -> vector<16x128xf32>
    %c1 = arith.constant 1 : index
    %c0_11 = arith.constant 0 : index
    %c0_12 = arith.constant 0 : index
    %14 = vector.load %arg4[%c1, %c0_11, %c0_12] : memref<8x1x128xf32, #tpu.memory_space<vmem>>, vector<1x1x128xf32>
    %15 = vector.shape_cast %14 : vector<1x1x128xf32> to vector<1x128xf32>
    %16 = vector.broadcast %15 : vector<1x128xf32> to vector<16x128xf32>
    %17 = arith.addf %13, %16 : vector<16x128xf32>
    %cst_13 = arith.constant 0.000000e+00 : f32
    %18 = vector.broadcast %cst_13 : f32 to vector<16x128xf32>
    %19 = arith.maximumf %17, %18 : vector<16x128xf32>
    %20 = arith.truncf %19 : vector<16x128xf32> to vector<16x128xbf16>
    %c1_14 = arith.constant 1 : index
    %c0_15 = arith.constant 0 : index
    %c0_16 = arith.constant 0 : index
    %21 = vector.load %arg3[%c1_14, %c0_15, %c0_16] : memref<7x128x128xbf16, #tpu.memory_space<vmem>>, vector<1x128x128xbf16>
    %22 = vector.shape_cast %21 : vector<1x128x128xbf16> to vector<128x128xbf16>
    %cst_17 = arith.constant dense<0.000000e+00> : vector<16x128xf32>
    %23 = tpu.matmul %20, %22, %cst_17 {dimension_numbers = #tpu.dot_dimension_numbers<[1], [0], [0], [1], [0, 0, 1, 1], [], []>} : vector<16x128xbf16>, vector<128x128xbf16>, vector<16x128xf32> -> vector<16x128xf32>
    %c2 = arith.constant 2 : index
    %c0_18 = arith.constant 0 : index
    %c0_19 = arith.constant 0 : index
    %24 = vector.load %arg4[%c2, %c0_18, %c0_19] : memref<8x1x128xf32, #tpu.memory_space<vmem>>, vector<1x1x128xf32>
    %25 = vector.shape_cast %24 : vector<1x1x128xf32> to vector<1x128xf32>
    %26 = vector.broadcast %25 : vector<1x128xf32> to vector<16x128xf32>
    %27 = arith.addf %23, %26 : vector<16x128xf32>
    %cst_20 = arith.constant 0.000000e+00 : f32
    %28 = vector.broadcast %cst_20 : f32 to vector<16x128xf32>
    %29 = arith.maximumf %27, %28 : vector<16x128xf32>
    %30 = arith.truncf %29 : vector<16x128xf32> to vector<16x128xbf16>
    %c2_21 = arith.constant 2 : index
    %c0_22 = arith.constant 0 : index
    %c0_23 = arith.constant 0 : index
    %31 = vector.load %arg3[%c2_21, %c0_22, %c0_23] : memref<7x128x128xbf16, #tpu.memory_space<vmem>>, vector<1x128x128xbf16>
    %32 = vector.shape_cast %31 : vector<1x128x128xbf16> to vector<128x128xbf16>
    %cst_24 = arith.constant dense<0.000000e+00> : vector<16x128xf32>
    %33 = tpu.matmul %30, %32, %cst_24 {dimension_numbers = #tpu.dot_dimension_numbers<[1], [0], [0], [1], [0, 0, 1, 1], [], []>} : vector<16x128xbf16>, vector<128x128xbf16>, vector<16x128xf32> -> vector<16x128xf32>
    %c3 = arith.constant 3 : index
    %c0_25 = arith.constant 0 : index
    %c0_26 = arith.constant 0 : index
    %34 = vector.load %arg4[%c3, %c0_25, %c0_26] : memref<8x1x128xf32, #tpu.memory_space<vmem>>, vector<1x1x128xf32>
    %35 = vector.shape_cast %34 : vector<1x1x128xf32> to vector<1x128xf32>
    %36 = vector.broadcast %35 : vector<1x128xf32> to vector<16x128xf32>
    %37 = arith.addf %33, %36 : vector<16x128xf32>
    %cst_27 = arith.constant 0.000000e+00 : f32
    %38 = vector.broadcast %cst_27 : f32 to vector<16x128xf32>
    %39 = arith.maximumf %37, %38 : vector<16x128xf32>
    %40 = arith.truncf %39 : vector<16x128xf32> to vector<16x128xbf16>
    %c3_28 = arith.constant 3 : index
    %c0_29 = arith.constant 0 : index
    %c0_30 = arith.constant 0 : index
    %41 = vector.load %arg3[%c3_28, %c0_29, %c0_30] : memref<7x128x128xbf16, #tpu.memory_space<vmem>>, vector<1x128x128xbf16>
    %42 = vector.shape_cast %41 : vector<1x128x128xbf16> to vector<128x128xbf16>
    %cst_31 = arith.constant dense<0.000000e+00> : vector<16x128xf32>
    %43 = tpu.matmul %40, %42, %cst_31 {dimension_numbers = #tpu.dot_dimension_numbers<[1], [0], [0], [1], [0, 0, 1, 1], [], []>} : vector<16x128xbf16>, vector<128x128xbf16>, vector<16x128xf32> -> vector<16x128xf32>
    %c4 = arith.constant 4 : index
    %c0_32 = arith.constant 0 : index
    %c0_33 = arith.constant 0 : index
    %44 = vector.load %arg4[%c4, %c0_32, %c0_33] : memref<8x1x128xf32, #tpu.memory_space<vmem>>, vector<1x1x128xf32>
    %45 = vector.shape_cast %44 : vector<1x1x128xf32> to vector<1x128xf32>
    %46 = vector.broadcast %45 : vector<1x128xf32> to vector<16x128xf32>
    %47 = arith.addf %43, %46 : vector<16x128xf32>
    %cst_34 = arith.constant 0.000000e+00 : f32
    %48 = vector.broadcast %cst_34 : f32 to vector<16x128xf32>
    %49 = arith.maximumf %47, %48 : vector<16x128xf32>
    %50 = arith.truncf %49 : vector<16x128xf32> to vector<16x128xbf16>
    %c4_35 = arith.constant 4 : index
    %c0_36 = arith.constant 0 : index
    %c0_37 = arith.constant 0 : index
    %51 = vector.load %arg3[%c4_35, %c0_36, %c0_37] : memref<7x128x128xbf16, #tpu.memory_space<vmem>>, vector<1x128x128xbf16>
    %52 = vector.shape_cast %51 : vector<1x128x128xbf16> to vector<128x128xbf16>
    %cst_38 = arith.constant dense<0.000000e+00> : vector<16x128xf32>
    %53 = tpu.matmul %50, %52, %cst_38 {dimension_numbers = #tpu.dot_dimension_numbers<[1], [0], [0], [1], [0, 0, 1, 1], [], []>} : vector<16x128xbf16>, vector<128x128xbf16>, vector<16x128xf32> -> vector<16x128xf32>
    %c5 = arith.constant 5 : index
    %c0_39 = arith.constant 0 : index
    %c0_40 = arith.constant 0 : index
    %54 = vector.load %arg4[%c5, %c0_39, %c0_40] : memref<8x1x128xf32, #tpu.memory_space<vmem>>, vector<1x1x128xf32>
    %55 = vector.shape_cast %54 : vector<1x1x128xf32> to vector<1x128xf32>
    %56 = vector.broadcast %55 : vector<1x128xf32> to vector<16x128xf32>
    %57 = arith.addf %53, %56 : vector<16x128xf32>
    %cst_41 = arith.constant 0.000000e+00 : f32
    %58 = vector.broadcast %cst_41 : f32 to vector<16x128xf32>
    %59 = arith.maximumf %57, %58 : vector<16x128xf32>
    %60 = arith.truncf %59 : vector<16x128xf32> to vector<16x128xbf16>
    %c5_42 = arith.constant 5 : index
    %c0_43 = arith.constant 0 : index
    %c0_44 = arith.constant 0 : index
    %61 = vector.load %arg3[%c5_42, %c0_43, %c0_44] : memref<7x128x128xbf16, #tpu.memory_space<vmem>>, vector<1x128x128xbf16>
    %62 = vector.shape_cast %61 : vector<1x128x128xbf16> to vector<128x128xbf16>
    %cst_45 = arith.constant dense<0.000000e+00> : vector<16x128xf32>
    %63 = tpu.matmul %60, %62, %cst_45 {dimension_numbers = #tpu.dot_dimension_numbers<[1], [0], [0], [1], [0, 0, 1, 1], [], []>} : vector<16x128xbf16>, vector<128x128xbf16>, vector<16x128xf32> -> vector<16x128xf32>
    %c6 = arith.constant 6 : index
    %c0_46 = arith.constant 0 : index
    %c0_47 = arith.constant 0 : index
    %64 = vector.load %arg4[%c6, %c0_46, %c0_47] : memref<8x1x128xf32, #tpu.memory_space<vmem>>, vector<1x1x128xf32>
    %65 = vector.shape_cast %64 : vector<1x1x128xf32> to vector<1x128xf32>
    %66 = vector.broadcast %65 : vector<1x128xf32> to vector<16x128xf32>
    %67 = arith.addf %63, %66 : vector<16x128xf32>
    %cst_48 = arith.constant 0.000000e+00 : f32
    %68 = vector.broadcast %cst_48 : f32 to vector<16x128xf32>
    %69 = arith.maximumf %67, %68 : vector<16x128xf32>
    %70 = arith.truncf %69 : vector<16x128xf32> to vector<16x128xbf16>
    %c6_49 = arith.constant 6 : index
    %c0_50 = arith.constant 0 : index
    %c0_51 = arith.constant 0 : index
    %71 = vector.load %arg3[%c6_49, %c0_50, %c0_51] : memref<7x128x128xbf16, #tpu.memory_space<vmem>>, vector<1x128x128xbf16>
    %72 = vector.shape_cast %71 : vector<1x128x128xbf16> to vector<128x128xbf16>
    %cst_52 = arith.constant dense<0.000000e+00> : vector<16x128xf32>
    %73 = tpu.matmul %70, %72, %cst_52 {dimension_numbers = #tpu.dot_dimension_numbers<[1], [0], [0], [1], [0, 0, 1, 1], [], []>} : vector<16x128xbf16>, vector<128x128xbf16>, vector<16x128xf32> -> vector<16x128xf32>
    %c7 = arith.constant 7 : index
    %c0_53 = arith.constant 0 : index
    %c0_54 = arith.constant 0 : index
    %74 = vector.load %arg4[%c7, %c0_53, %c0_54] : memref<8x1x128xf32, #tpu.memory_space<vmem>>, vector<1x1x128xf32>
    %75 = vector.shape_cast %74 : vector<1x1x128xf32> to vector<1x128xf32>
    %76 = vector.broadcast %75 : vector<1x128xf32> to vector<16x128xf32>
    %77 = arith.addf %73, %76 : vector<16x128xf32>
    %78 = arith.truncf %77 : vector<16x128xf32> to vector<16x128xbf16>
    %c0_55 = arith.constant 0 : index
    %c0_56 = arith.constant 0 : index
    %79 = vector.load %arg5[%c0_55, %c0_56] : memref<16x128xbf16, #tpu.memory_space<vmem>>, vector<16x128xbf16>
    tpu.vector_store %arg5[%c0_55, %c0_56], %78 {strides = array<i32>} : memref<16x128xbf16, #tpu.memory_space<vmem>>, vector<16x128xbf16>,
    return
  }
  func.func @transform_0(%arg0: i32) -> (i32, i32) {
    %c0_i32 = arith.constant 0 : i32
    %c0_i32_0 = arith.constant 0 : i32
    return %arg0, %c0_i32 : i32, i32
  }
  func.func @transform_1(%arg0: i32) -> (i32, i32) {
    %c0_i32 = arith.constant 0 : i32
    %c0_i32_0 = arith.constant 0 : i32
    %c0_i32_1 = arith.constant 0 : i32
    return %c0_i32, %c0_i32_0 : i32, i32
  }
  func.func @transform_2(%arg0: i32) -> (i32, i32, i32) {
    %c0_i32 = arith.constant 0 : i32
    %c0_i32_0 = arith.constant 0 : i32
    %c0_i32_1 = arith.constant 0 : i32
    %c0_i32_2 = arith.constant 0 : i32
    return %c0_i32, %c0_i32_0, %c0_i32_1 : i32, i32, i32
  }
  func.func @transform_3(%arg0: i32) -> (i32, i32, i32) {
    %c0_i32 = arith.constant 0 : i32
    %c0_i32_0 = arith.constant 0 : i32
    %c0_i32_1 = arith.constant 0 : i32
    %c0_i32_2 = arith.constant 0 : i32
    return %c0_i32, %c0_i32_0, %c0_i32_1 : i32, i32, i32
  }
  func.func @transform_4(%arg0: i32) -> (i32, i32) {
    %c0_i32 = arith.constant 0 : i32
    %c0_i32_0 = arith.constant 0 : i32
    return %arg0, %c0_i32 : i32, i32
  }
}

</mosaic_0001>

<llo_original>
// kernel: tpu_custom_call.1
$region0: #{tpu_custom_call.1}
  #allocation0 [shape = 'u32[]', space=smem, size = 0x4, offset = 0x4, fixed_abs, tag = 'smem constant byte address 0x4 - core index']
  #allocation1 [shape = 'u32[72,128]{1,0:T(1,128)}', space=vmem, size = 0x9000, scoped, tag = 'internal scratch']
  %s0 = inlined_call_operand.hbm [shape: f32[16,16], index: 0, kind: input, shape index: {}]
  %s1 = inlined_call_operand.hbm [shape: bf16[16,128], index: 1, kind: input, shape index: {}]
  %s2 = inlined_call_operand.hbm [shape: bf16[7,128,128], index: 2, kind: input, shape index: {}]
  %s3 = inlined_call_operand.hbm [shape: f32[8,1,128], index: 3, kind: input, shape index: {}]
  %s4 = inlined_call_operand.hbm [shape: bf16[16,128], index: 4, kind: output, shape index: {}]
  %s5 = sld [smem:[#allocation0]]
  $region42: #{tpu_custom_call.1} parent=0
    _
  %s7 = ssub.s32 1, %s5
  %s8 = scalar_select 0, %s7, %s5
  $region1: #{tpu_custom_call.1} parent=0
    #allocation2 [shape = 'u8[8192]{0}', space=vmem, size = 0x2000, scoped, tag = 'input window, operand 0, single buffered']
    #allocation3 [shape = 's32[1]{0}', space=sflag, size = 0x4, scoped, tag = 'scoped memory for tpu_custom_call.1']
    #allocation4 [shape = 's32[1]{0}', space=sflag, size = 0x4, scoped, tag = 'scoped memory for tpu_custom_call.1']
    #allocation5 [shape = 'u8[4096]{0}', space=vmem, size = 0x1000, scoped, tag = 'input window, operand 1, single buffered']
    #allocation6 [shape = 's32[1]{0}', space=sflag, size = 0x4, scoped, tag = 'scoped memory for tpu_custom_call.1']
    #allocation7 [shape = 'u8[229376]{0}', space=vmem, size = 0x38000, scoped, tag = 'input window, operand 2, single buffered']
    #allocation8 [shape = 'u8[4096]{0}', space=vmem, size = 0x1000, scoped, tag = 'input window, operand 3, single buffered']
    #allocation9 [shape = 's32[1]{0}', space=sflag, size = 0x4, scoped, tag = 'scoped memory for tpu_custom_call.1']
    #allocation10 [shape = 'u8[4096]{0}', space=vmem, size = 0x1000, scoped, tag = 'output window, operand 0, single buffered']
    %9 = vsyncpa [#allocation3], 0
    %10 = vsyncpa [#allocation6], 0
    %11 = vsyncpa [#allocation9], 0
    %12 = vsyncpa [#allocation4], 0
    // Predicated region
    $region2: #{tpu_custom_call.1} parent=1 // pred_check
      _
    $region3: #{tpu_custom_call.1} parent=1 // pred_check_branch
      %14 = sbr.rel (0) target = $region5
    $region4: #{tpu_custom_call.1} parent=1 // pred_region
      %16 = vsyncadd [#allocation3], 0
      %s17 = sshll.u32 %s0, 4
      %s18 = int_to_ptr.hbm [resolvable:$true] %s17
      %s19 = sshll.u32 [#allocation2], 4
      %s20 = int_to_ptr.vmem [resolvable:$true] %s19
      %25 = dma.hbm_to_vmem [thread:$0]  %s18, 256, %s20, [#allocation3], 128, 128, 8
    $region5: #{tpu_custom_call.1} parent=1 // pred_fallthru
      _
    // Predicated region
    $region6: #{tpu_custom_call.1} parent=1 // pred_check
      _
    $region7: #{tpu_custom_call.1} parent=1 // pred_check_branch
      %27 = sbr.rel (0) target = $region9
    $region8: #{tpu_custom_call.1} parent=1 // pred_region
      %29 = vsyncadd [#allocation6], 0
      %s30 = sshll.u32 %s1, 4
      %s31 = int_to_ptr.hbm [resolvable:$true] %s30
      %s32 = sshll.u32 [#allocation5], 4
      %s33 = int_to_ptr.vmem [resolvable:$true] %s32
      %38 = dma.hbm_to_vmem [thread:$0]  %s31, 128, %s33, [#allocation6], 64, 64, 4
    $region9: #{tpu_custom_call.1} parent=1 // pred_fallthru
      _
    // Predicated region
    $region10: #{tpu_custom_call.1} parent=1 // pred_check
      _
    $region11: #{tpu_custom_call.1} parent=1 // pred_check_branch
      %40 = sbr.rel (0) target = $region13
    $region12: #{tpu_custom_call.1} parent=1 // pred_region
      %42 = vsyncadd [#allocation6], 0
      %s43 = sshll.u32 %s2, 4
      %s44 = int_to_ptr.hbm [resolvable:$true] %s43
      %s45 = sshll.u32 [#allocation7], 4
      %s46 = int_to_ptr.vmem [resolvable:$true] %s45
      %51 = dma.hbm_to_vmem [thread:$0]  %s44, 7168, %s46, [#allocation6], 64, 64, 4
    $region13: #{tpu_custom_call.1} parent=1 // pred_fallthru
      _
    // Predicated region
    $region14: #{tpu_custom_call.1} parent=1 // pred_check
      _
    $region15: #{tpu_custom_call.1} parent=1 // pred_check_branch
      %53 = sbr.rel (0) target = $region17
    $region16: #{tpu_custom_call.1} parent=1 // pred_region
      %55 = vsyncadd [#allocation9], 0
      %s56 = sshll.u32 %s3, 4
      %s57 = int_to_ptr.hbm [resolvable:$true] %s56
      %s58 = sshll.u32 [#allocation8], 4
      %s59 = int_to_ptr.vmem [resolvable:$true] %s58
      %64 = dma.hbm_to_vmem [thread:$0]  %s57, 128, %s59, [#allocation9], 16, 16, 1
    $region17: #{tpu_custom_call.1} parent=1 // pred_fallthru
      _
    // Predicated region
    $region18: #{tpu_custom_call.1} parent=1 // pred_check
      _
    $region19: #{tpu_custom_call.1} parent=1 // pred_check_branch
      %66 = sbr.rel (0) target = $region21
    $region20: #{tpu_custom_call.1} parent=1 // pred_region
      %68 = dma.done [#allocation3], 256
    $region21: #{tpu_custom_call.1} parent=1 // pred_fallthru
      _
    // Predicated region
    $region22: #{tpu_custom_call.1} parent=1 // pred_check
      _
    $region23: #{tpu_custom_call.1} parent=1 // pred_check_branch
      %70 = sbr.rel (0) target = $region25
    $region24: #{tpu_custom_call.1} parent=1 // pred_region
      %72 = dma.done [#allocation6], 128
    $region25: #{tpu_custom_call.1} parent=1 // pred_fallthru
      _
    // Predicated region
    $region26: #{tpu_custom_call.1} parent=1 // pred_check
      _
    $region27: #{tpu_custom_call.1} parent=1 // pred_check_branch
      %74 = sbr.rel (0) target = $region29
    $region28: #{tpu_custom_call.1} parent=1 // pred_region
      %76 = dma.done [#allocation6], 7168
    $region29: #{tpu_custom_call.1} parent=1 // pred_fallthru
      _
    // Predicated region
    $region30: #{tpu_custom_call.1} parent=1 // pred_check
      _
    $region31: #{tpu_custom_call.1} parent=1 // pred_check_branch
      %78 = sbr.rel (0) target = $region33
    $region32: #{tpu_custom_call.1} parent=1 // pred_region
      %80 = dma.done [#allocation9], 128
    $region33: #{tpu_custom_call.1} parent=1 // pred_fallthru
      _
    %v82 = vld [vmem:[#allocation2] sm:$0xff]
    %v83 = vld [vmem:[#allocation2 + $0x8] sm:$0xff]
    %v84 = vpack.c.bf16 %v83, %v82
    %v85 = vld [vmem:[#allocation5] sm:$0xf]
    %v86 = vld [vmem:[#allocation5 + $0x4] sm:$0xf]
    %v87 = vld [vmem:[#allocation8] sm:$0x1]
    %v89 = vperm.slane %v87, 0
    %v93 = vunpack.c.l.b16 %v85
    %v94 = vunpack.c.l.b16 %v86
    %v95 = vpack.c.b16 %v94, %v93
    %vm97 = vcmask 130048
    %v99 = vsel %vm97, %v84, 0
    %101 = vmatpush.bf16.msra.mxu0 0
    %102 = vmatpush.bf16.msra.mxu0 0
    %103 = vmatpush.bf16.msra.mxu0 0
    %104 = vmatpush.bf16.msra.mxu0 0
    %105 = vmatpush.bf16.msra.mxu0 0
    %106 = vmatpush.bf16.msra.mxu0 0
    %107 = vmatpush.bf16.msra.mxu0 0
    %108 = vmatpush.bf16.msra.mxu0 %v95
    %109 = vmatmul.bf16.gmra.mxu0 %v99
    %v110 = vpop.f32.mrf.mxu0
    %v111 = vadd.f32 %v89, %v110
    %v112 = vpop.f32.mrf.mxu0
    %v113 = vadd.f32 %v89, %v112
    %114 = vdwg.mxu0
    %v115 = vmax.f32 %v111, 0.0
    %v116 = vmax.f32 %v113, 0.0
    %v117 = vpack.c.bf16 %v116, %v115
    %v118 = vld [vmem:[#allocation7] sm:$0xf]
    %v119 = vld [vmem:[#allocation7 + $0x4] sm:$0xf]
    %v120 = vld [vmem:[#allocation7 + $0x8] sm:$0xf]
    %v121 = vld [vmem:[#allocation7 + $0xc] sm:$0xf]
    %v122 = vld [vmem:[#allocation7 + $0x10] sm:$0xf]
    %v123 = vld [vmem:[#allocation7 + $0x14] sm:$0xf]
    %v124 = vld [vmem:[#allocation7 + $0x18] sm:$0xf]
    %v125 = vld [vmem:[#allocation7 + $0x1c] sm:$0xf]
    %v126 = vld [vmem:[#allocation7 + $0x20] sm:$0xf]
    %v127 = vld [vmem:[#allocation7 + $0x24] sm:$0xf]
    %v128 = vld [vmem:[#allocation7 + $0x28] sm:$0xf]
    %v129 = vld [vmem:[#allocation7 + $0x2c] sm:$0xf]
    %v130 = vld [vmem:[#allocation7 + $0x30] sm:$0xf]
    %v131 = vld [vmem:[#allocation7 + $0x34] sm:$0xf]
    %v132 = vld [vmem:[#allocation7 + $0x38] sm:$0xf]
    %v133 = vld [vmem:[#allocation7 + $0x3c] sm:$0xf]
    %s134 = scalar_lea.vmem [#allocation8], 1
    %v135 = vld [vmem:[%s134] sm:$0x1]
    %v137 = vperm.slane %v135, 0
    %v155 = vunpack.c.l.b16 %v118
    %v156 = vunpack.c.l.b16 %v119
    %v157 = vunpack.c.l.b16 %v120
    %v158 = vunpack.c.l.b16 %v121
    %v159 = vunpack.c.l.b16 %v122
    %v160 = vunpack.c.l.b16 %v123
    %v161 = vunpack.c.l.b16 %v124
    %v162 = vunpack.c.l.b16 %v125
    %v163 = vunpack.c.l.b16 %v126
    %v164 = vunpack.c.l.b16 %v127
    %v165 = vunpack.c.l.b16 %v128
    %v166 = vunpack.c.l.b16 %v129
    %v167 = vunpack.c.l.b16 %v130
    %v168 = vunpack.c.l.b16 %v131
    %v169 = vunpack.c.l.b16 %v132
    %v170 = vunpack.c.l.b16 %v133
    %v171 = vpack.c.b16 %v156, %v155
    %v172 = vpack.c.b16 %v158, %v157
    %v173 = vpack.c.b16 %v160, %v159
    %v174 = vpack.c.b16 %v162, %v161
    %v175 = vpack.c.b16 %v164, %v163
    %v176 = vpack.c.b16 %v166, %v165
    %v177 = vpack.c.b16 %v168, %v167
    %v178 = vpack.c.b16 %v170, %v169
    %187 = vmatpush.bf16.msra.mxu0 %v178
    %188 = vmatpush.bf16.msra.mxu0 %v177
    %189 = vmatpush.bf16.msra.mxu0 %v176
    %190 = vmatpush.bf16.msra.mxu0 %v175
    %191 = vmatpush.bf16.msra.mxu0 %v174
    %192 = vmatpush.bf16.msra.mxu0 %v173
    %193 = vmatpush.bf16.msra.mxu0 %v172
    %194 = vmatpush.bf16.msra.mxu0 %v171
    %195 = vmatmul.bf16.gmra.mxu0 %v117
    %v196 = vpop.f32.mrf.mxu0
    %v197 = vadd.f32 %v137, %v196
    %v198 = vpop.f32.mrf.mxu0
    %v199 = vadd.f32 %v137, %v198
    %200 = vdwg.mxu0
    %v201 = vmax.f32 %v197, 0.0
    %v202 = vmax.f32 %v199, 0.0
    %v203 = vpack.c.bf16 %v202, %v201
    %s204 = scalar_lea.vmem [#allocation7], 64
    %v205 = vld [vmem:[%s204] sm:$0xf]
    %v206 = vld [vmem:[%s204 + $0x4] sm:$0xf]
    %v207 = vld [vmem:[%s204 + $0x8] sm:$0xf]
    %v208 = vld [vmem:[%s204 + $0xc] sm:$0xf]
    %v209 = vld [vmem:[%s204 + $0x10] sm:$0xf]
    %v210 = vld [vmem:[%s204 + $0x14] sm:$0xf]
    %v211 = vld [vmem:[%s204 + $0x18] sm:$0xf]
    %v212 = vld [vmem:[%s204 + $0x1c] sm:$0xf]
    %v213 = vld [vmem:[%s204 + $0x20] sm:$0xf]
    %v214 = vld [vmem:[%s204 + $0x24] sm:$0xf]
    %v215 = vld [vmem:[%s204 + $0x28] sm:$0xf]
    %v216 = vld [vmem:[%s204 + $0x2c] sm:$0xf]
    %v217 = vld [vmem:[%s204 + $0x30] sm:$0xf]
    %v218 = vld [vmem:[%s204 + $0x34] sm:$0xf]
    %v219 = vld [vmem:[%s204 + $0x38] sm:$0xf]
    %v220 = vld [vmem:[%s204 + $0x3c] sm:$0xf]
    %s221 = scalar_lea.vmem [#allocation8], 2
    %v222 = vld [vmem:[%s221] sm:$0x1]
    %v224 = vperm.slane %v222, 0
    %v242 = vunpack.c.l.b16 %v205
    %v243 = vunpack.c.l.b16 %v206
    %v244 = vunpack.c.l.b16 %v207
    %v245 = vunpack.c.l.b16 %v208
    %v246 = vunpack.c.l.b16 %v209
    %v247 = vunpack.c.l.b16 %v210
    %v248 = vunpack.c.l.b16 %v211
    %v249 = vunpack.c.l.b16 %v212
    %v250 = vunpack.c.l.b16 %v213
    %v251 = vunpack.c.l.b16 %v214
    %v252 = vunpack.c.l.b16 %v215
    %v253 = vunpack.c.l.b16 %v216
    %v254 = vunpack.c.l.b16 %v217
    %v255 = vunpack.c.l.b16 %v218
    %v256 = vunpack.c.l.b16 %v219
    %v257 = vunpack.c.l.b16 %v220
    %v258 = vpack.c.b16 %v243, %v242
    %v259 = vpack.c.b16 %v245, %v244
    %v260 = vpack.c.b16 %v247, %v246
    %v261 = vpack.c.b16 %v249, %v248
    %v262 = vpack.c.b16 %v251, %v250
    %v263 = vpack.c.b16 %v253, %v252
    %v264 = vpack.c.b16 %v255, %v254
    %v265 = vpack.c.b16 %v257, %v256
    %274 = vmatpush.bf16.msra.mxu0 %v265
    %275 = vmatpush.bf16.msra.mxu0 %v264
    %276 = vmatpush.bf16.msra.mxu0 %v263
    %277 = vmatpush.bf16.msra.mxu0 %v262
    %278 = vmatpush.bf16.msra.mxu0 %v261
    %279 = vmatpush.bf16.msra.mxu0 %v260
    %280 = vmatpush.bf16.msra.mxu0 %v259
    %281 = vmatpush.bf16.msra.mxu0 %v258
    %282 = vmatmul.bf16.gmra.mxu0 %v203
    %v283 = vpop.f32.mrf.mxu0
    %v284 = vadd.f32 %v224, %v283
    %v285 = vpop.f32.mrf.mxu0
    %v286 = vadd.f32 %v224, %v285
    %287 = vdwg.mxu0
    %v288 = vmax.f32 %v284, 0.0
    %v289 = vmax.f32 %v286, 0.0
    %v290 = vpack.c.bf16 %v289, %v288
    %s291 = scalar_lea.vmem [#allocation7], 128
    %v292 = vld [vmem:[%s291] sm:$0xf]
    %v293 = vld [vmem:[%s291 + $0x4] sm:$0xf]
    %v294 = vld [vmem:[%s291 + $0x8] sm:$0xf]
    %v295 = vld [vmem:[%s291 + $0xc] sm:$0xf]
    %v296 = vld [vmem:[%s291 + $0x10] sm:$0xf]
    %v297 = vld [vmem:[%s291 + $0x14] sm:$0xf]
    %v298 = vld [vmem:[%s291 + $0x18] sm:$0xf]
    %v299 = vld [vmem:[%s291 + $0x1c] sm:$0xf]
    %v300 = vld [vmem:[%s291 + $0x20] sm:$0xf]
    %v301 = vld [vmem:[%s291 + $0x24] sm:$0xf]
    %v302 = vld [vmem:[%s291 + $0x28] sm:$0xf]
    %v303 = vld [vmem:[%s291 + $0x2c] sm:$0xf]
    %v304 = vld [vmem:[%s291 + $0x30] sm:$0xf]
    %v305 = vld [vmem:[%s291 + $0x34] sm:$0xf]
    %v306 = vld [vmem:[%s291 + $0x38] sm:$0xf]
    %v307 = vld [vmem:[%s291 + $0x3c] sm:$0xf]
    %s308 = scalar_lea.vmem [#allocation8], 3
    %v309 = vld [vmem:[%s308] sm:$0x1]
    %v311 = vperm.slane %v309, 0
    %v329 = vunpack.c.l.b16 %v292
    %v330 = vunpack.c.l.b16 %v293
    %v331 = vunpack.c.l.b16 %v294
    %v332 = vunpack.c.l.b16 %v295
    %v333 = vunpack.c.l.b16 %v296
    %v334 = vunpack.c.l.b16 %v297
    %v335 = vunpack.c.l.b16 %v298
    %v336 = vunpack.c.l.b16 %v299
    %v337 = vunpack.c.l.b16 %v300
    %v338 = vunpack.c.l.b16 %v301
    %v339 = vunpack.c.l.b16 %v302
    %v340 = vunpack.c.l.b16 %v303
    %v341 = vunpack.c.l.b16 %v304
    %v342 = vunpack.c.l.b16 %v305
    %v343 = vunpack.c.l.b16 %v306
    %v344 = vunpack.c.l.b16 %v307
    %v345 = vpack.c.b16 %v330, %v329
    %v346 = vpack.c.b16 %v332, %v331
    %v347 = vpack.c.b16 %v334, %v333
    %v348 = vpack.c.b16 %v336, %v335
    %v349 = vpack.c.b16 %v338, %v337
    %v350 = vpack.c.b16 %v340, %v339
    %v351 = vpack.c.b16 %v342, %v341
    %v352 = vpack.c.b16 %v344, %v343
    %361 = vmatpush.bf16.msra.mxu0 %v352
    %362 = vmatpush.bf16.msra.mxu0 %v351
    %363 = vmatpush.bf16.msra.mxu0 %v350
    %364 = vmatpush.bf16.msra.mxu0 %v349
    %365 = vmatpush.bf16.msra.mxu0 %v348
    %366 = vmatpush.bf16.msra.mxu0 %v347
    %367 = vmatpush.bf16.msra.mxu0 %v346
    %368 = vmatpush.bf16.msra.mxu0 %v345
    %369 = vmatmul.bf16.gmra.mxu0 %v290
    %v370 = vpop.f32.mrf.mxu0
    %v371 = vadd.f32 %v311, %v370
    %v372 = vpop.f32.mrf.mxu0
    %v373 = vadd.f32 %v311, %v372
    %374 = vdwg.mxu0
    %v375 = vmax.f32 %v371, 0.0
    %v376 = vmax.f32 %v373, 0.0
    %v377 = vpack.c.bf16 %v376, %v375
    %s378 = scalar_lea.vmem [#allocation7], 192
    %v379 = vld [vmem:[%s378] sm:$0xf]
    %v380 = vld [vmem:[%s378 + $0x4] sm:$0xf]
    %v381 = vld [vmem:[%s378 + $0x8] sm:$0xf]
    %v382 = vld [vmem:[%s378 + $0xc] sm:$0xf]
    %v383 = vld [vmem:[%s378 + $0x10] sm:$0xf]
    %v384 = vld [vmem:[%s378 + $0x14] sm:$0xf]
    %v385 = vld [vmem:[%s378 + $0x18] sm:$0xf]
    %v386 = vld [vmem:[%s378 + $0x1c] sm:$0xf]
    %v387 = vld [vmem:[%s378 + $0x20] sm:$0xf]
    %v388 = vld [vmem:[%s378 + $0x24] sm:$0xf]
    %v389 = vld [vmem:[%s378 + $0x28] sm:$0xf]
    %v390 = vld [vmem:[%s378 + $0x2c] sm:$0xf]
    %v391 = vld [vmem:[%s378 + $0x30] sm:$0xf]
    %v392 = vld [vmem:[%s378 + $0x34] sm:$0xf]
    %v393 = vld [vmem:[%s378 + $0x38] sm:$0xf]
    %v394 = vld [vmem:[%s378 + $0x3c] sm:$0xf]
    %s395 = scalar_lea.vmem [#allocation8], 4
    %v396 = vld [vmem:[%s395] sm:$0x1]
    %v398 = vperm.slane %v396, 0
    %v416 = vunpack.c.l.b16 %v379
    %v417 = vunpack.c.l.b16 %v380
    %v418 = vunpack.c.l.b16 %v381
    %v419 = vunpack.c.l.b16 %v382
    %v420 = vunpack.c.l.b16 %v383
    %v421 = vunpack.c.l.b16 %v384
    %v422 = vunpack.c.l.b16 %v385
    %v423 = vunpack.c.l.b16 %v386
    %v424 = vunpack.c.l.b16 %v387
    %v425 = vunpack.c.l.b16 %v388
    %v426 = vunpack.c.l.b16 %v389
    %v427 = vunpack.c.l.b16 %v390
    %v428 = vunpack.c.l.b16 %v391
    %v429 = vunpack.c.l.b16 %v392
    %v430 = vunpack.c.l.b16 %v393
    %v431 = vunpack.c.l.b16 %v394
    %v432 = vpack.c.b16 %v417, %v416
    %v433 = vpack.c.b16 %v419, %v418
    %v434 = vpack.c.b16 %v421, %v420
    %v435 = vpack.c.b16 %v423, %v422
    %v436 = vpack.c.b16 %v425, %v424
    %v437 = vpack.c.b16 %v427, %v426
    %v438 = vpack.c.b16 %v429, %v428
    %v439 = vpack.c.b16 %v431, %v430
    %448 = vmatpush.bf16.msra.mxu0 %v439
    %449 = vmatpush.bf16.msra.mxu0 %v438
    %450 = vmatpush.bf16.msra.mxu0 %v437
    %451 = vmatpush.bf16.msra.mxu0 %v436
    %452 = vmatpush.bf16.msra.mxu0 %v435
    %453 = vmatpush.bf16.msra.mxu0 %v434
    %454 = vmatpush.bf16.msra.mxu0 %v433
    %455 = vmatpush.bf16.msra.mxu0 %v432
    %456 = vmatmul.bf16.gmra.mxu0 %v377
    %v457 = vpop.f32.mrf.mxu0
    %v458 = vadd.f32 %v398, %v457
    %v459 = vpop.f32.mrf.mxu0
    %v460 = vadd.f32 %v398, %v459
    %461 = vdwg.mxu0
    %v462 = vmax.f32 %v458, 0.0
    %v463 = vmax.f32 %v460, 0.0
    %v464 = vpack.c.bf16 %v463, %v462
    %s465 = scalar_lea.vmem [#allocation7], 256
    %v466 = vld [vmem:[%s465] sm:$0xf]
    %v467 = vld [vmem:[%s465 + $0x4] sm:$0xf]
    %v468 = vld [vmem:[%s465 + $0x8] sm:$0xf]
    %v469 = vld [vmem:[%s465 + $0xc] sm:$0xf]
    %v470 = vld [vmem:[%s465 + $0x10] sm:$0xf]
    %v471 = vld [vmem:[%s465 + $0x14] sm:$0xf]
    %v472 = vld [vmem:[%s465 + $0x18] sm:$0xf]
    %v473 = vld [vmem:[%s465 + $0x1c] sm:$0xf]
    %v474 = vld [vmem:[%s465 + $0x20] sm:$0xf]
    %v475 = vld [vmem:[%s465 + $0x24] sm:$0xf]
    %v476 = vld [vmem:[%s465 + $0x28] sm:$0xf]
    %v477 = vld [vmem:[%s465 + $0x2c] sm:$0xf]
    %v478 = vld [vmem:[%s465 + $0x30] sm:$0xf]
    %v479 = vld [vmem:[%s465 + $0x34] sm:$0xf]
    %v480 = vld [vmem:[%s465 + $0x38] sm:$0xf]
    %v481 = vld [vmem:[%s465 + $0x3c] sm:$0xf]
    %s482 = scalar_lea.vmem [#allocation8], 5
    %v483 = vld [vmem:[%s482] sm:$0x1]
    %v485 = vperm.slane %v483, 0
    %v503 = vunpack.c.l.b16 %v466
    %v504 = vunpack.c.l.b16 %v467
    %v505 = vunpack.c.l.b16 %v468
    %v506 = vunpack.c.l.b16 %v469
    %v507 = vunpack.c.l.b16 %v470
    %v508 = vunpack.c.l.b16 %v471
    %v509 = vunpack.c.l.b16 %v472
    %v510 = vunpack.c.l.b16 %v473
    %v511 = vunpack.c.l.b16 %v474
    %v512 = vunpack.c.l.b16 %v475
    %v513 = vunpack.c.l.b16 %v476
    %v514 = vunpack.c.l.b16 %v477
    %v515 = vunpack.c.l.b16 %v478
    %v516 = vunpack.c.l.b16 %v479
    %v517 = vunpack.c.l.b16 %v480
    %v518 = vunpack.c.l.b16 %v481
    %v519 = vpack.c.b16 %v504, %v503
    %v520 = vpack.c.b16 %v506, %v505
    %v521 = vpack.c.b16 %v508, %v507
    %v522 = vpack.c.b16 %v510, %v509
    %v523 = vpack.c.b16 %v512, %v511
    %v524 = vpack.c.b16 %v514, %v513
    %v525 = vpack.c.b16 %v516, %v515
    %v526 = vpack.c.b16 %v518, %v517
    %535 = vmatpush.bf16.msra.mxu0 %v526
    %536 = vmatpush.bf16.msra.mxu0 %v525
    %537 = vmatpush.bf16.msra.mxu0 %v524
    %538 = vmatpush.bf16.msra.mxu0 %v523
    %539 = vmatpush.bf16.msra.mxu0 %v522
    %540 = vmatpush.bf16.msra.mxu0 %v521
    %541 = vmatpush.bf16.msra.mxu0 %v520
    %542 = vmatpush.bf16.msra.mxu0 %v519
    %543 = vmatmul.bf16.gmra.mxu0 %v464
    %v544 = vpop.f32.mrf.mxu0
    %v545 = vadd.f32 %v485, %v544
    %v546 = vpop.f32.mrf.mxu0
    %v547 = vadd.f32 %v485, %v546
    %548 = vdwg.mxu0
    %v549 = vmax.f32 %v545, 0.0
    %v550 = vmax.f32 %v547, 0.0
    %v551 = vpack.c.bf16 %v550, %v549
    %s552 = scalar_lea.vmem [#allocation7], 320
    %v553 = vld [vmem:[%s552] sm:$0xf]
    %v554 = vld [vmem:[%s552 + $0x4] sm:$0xf]
    %v555 = vld [vmem:[%s552 + $0x8] sm:$0xf]
    %v556 = vld [vmem:[%s552 + $0xc] sm:$0xf]
    %v557 = vld [vmem:[%s552 + $0x10] sm:$0xf]
    %v558 = vld [vmem:[%s552 + $0x14] sm:$0xf]
    %v559 = vld [vmem:[%s552 + $0x18] sm:$0xf]
    %v560 = vld [vmem:[%s552 + $0x1c] sm:$0xf]
    %v561 = vld [vmem:[%s552 + $0x20] sm:$0xf]
    %v562 = vld [vmem:[%s552 + $0x24] sm:$0xf]
    %v563 = vld [vmem:[%s552 + $0x28] sm:$0xf]
    %v564 = vld [vmem:[%s552 + $0x2c] sm:$0xf]
    %v565 = vld [vmem:[%s552 + $0x30] sm:$0xf]
    %v566 = vld [vmem:[%s552 + $0x34] sm:$0xf]
    %v567 = vld [vmem:[%s552 + $0x38] sm:$0xf]
    %v568 = vld [vmem:[%s552 + $0x3c] sm:$0xf]
    %s569 = scalar_lea.vmem [#allocation8], 6
    %v570 = vld [vmem:[%s569] sm:$0x1]
    %v572 = vperm.slane %v570, 0
    %v590 = vunpack.c.l.b16 %v553
    %v591 = vunpack.c.l.b16 %v554
    %v592 = vunpack.c.l.b16 %v555
    %v593 = vunpack.c.l.b16 %v556
    %v594 = vunpack.c.l.b16 %v557
    %v595 = vunpack.c.l.b16 %v558
    %v596 = vunpack.c.l.b16 %v559
    %v597 = vunpack.c.l.b16 %v560
    %v598 = vunpack.c.l.b16 %v561
    %v599 = vunpack.c.l.b16 %v562
    %v600 = vunpack.c.l.b16 %v563
    %v601 = vunpack.c.l.b16 %v564
    %v602 = vunpack.c.l.b16 %v565
    %v603 = vunpack.c.l.b16 %v566
    %v604 = vunpack.c.l.b16 %v567
    %v605 = vunpack.c.l.b16 %v568
    %v606 = vpack.c.b16 %v591, %v590
    %v607 = vpack.c.b16 %v593, %v592
    %v608 = vpack.c.b16 %v595, %v594
    %v609 = vpack.c.b16 %v597, %v596
    %v610 = vpack.c.b16 %v599, %v598
    %v611 = vpack.c.b16 %v601, %v600
    %v612 = vpack.c.b16 %v603, %v602
    %v613 = vpack.c.b16 %v605, %v604
    %622 = vmatpush.bf16.msra.mxu0 %v613
    %623 = vmatpush.bf16.msra.mxu0 %v612
    %624 = vmatpush.bf16.msra.mxu0 %v611
    %625 = vmatpush.bf16.msra.mxu0 %v610
    %626 = vmatpush.bf16.msra.mxu0 %v609
    %627 = vmatpush.bf16.msra.mxu0 %v608
    %628 = vmatpush.bf16.msra.mxu0 %v607
    %629 = vmatpush.bf16.msra.mxu0 %v606
    %630 = vmatmul.bf16.gmra.mxu0 %v551
    %v631 = vpop.f32.mrf.mxu0
    %v632 = vadd.f32 %v572, %v631
    %v633 = vpop.f32.mrf.mxu0
    %v634 = vadd.f32 %v572, %v633
    %635 = vdwg.mxu0
    %v636 = vmax.f32 %v632, 0.0
    %v637 = vmax.f32 %v634, 0.0
    %v638 = vpack.c.bf16 %v637, %v636
    %s639 = scalar_lea.vmem [#allocation7], 384
    %v640 = vld [vmem:[%s639] sm:$0xf]
    %v641 = vld [vmem:[%s639 + $0x4] sm:$0xf]
    %v642 = vld [vmem:[%s639 + $0x8] sm:$0xf]
    %v643 = vld [vmem:[%s639 + $0xc] sm:$0xf]
    %v644 = vld [vmem:[%s639 + $0x10] sm:$0xf]
    %v645 = vld [vmem:[%s639 + $0x14] sm:$0xf]
    %v646 = vld [vmem:[%s639 + $0x18] sm:$0xf]
    %v647 = vld [vmem:[%s639 + $0x1c] sm:$0xf]
    %v648 = vld [vmem:[%s639 + $0x20] sm:$0xf]
    %v649 = vld [vmem:[%s639 + $0x24] sm:$0xf]
    %v650 = vld [vmem:[%s639 + $0x28] sm:$0xf]
    %v651 = vld [vmem:[%s639 + $0x2c] sm:$0xf]
    %v652 = vld [vmem:[%s639 + $0x30] sm:$0xf]
    %v653 = vld [vmem:[%s639 + $0x34] sm:$0xf]
    %v654 = vld [vmem:[%s639 + $0x38] sm:$0xf]
    %v655 = vld [vmem:[%s639 + $0x3c] sm:$0xf]
    %s656 = scalar_lea.vmem [#allocation8], 7
    %v657 = vld [vmem:[%s656] sm:$0x1]
    %v659 = vperm.slane %v657, 0
    %v677 = vunpack.c.l.b16 %v640
    %v678 = vunpack.c.l.b16 %v641
    %v679 = vunpack.c.l.b16 %v642
    %v680 = vunpack.c.l.b16 %v643
    %v681 = vunpack.c.l.b16 %v644
    %v682 = vunpack.c.l.b16 %v645
    %v683 = vunpack.c.l.b16 %v646
    %v684 = vunpack.c.l.b16 %v647
    %v685 = vunpack.c.l.b16 %v648
    %v686 = vunpack.c.l.b16 %v649
    %v687 = vunpack.c.l.b16 %v650
    %v688 = vunpack.c.l.b16 %v651
    %v689 = vunpack.c.l.b16 %v652
    %v690 = vunpack.c.l.b16 %v653
    %v691 = vunpack.c.l.b16 %v654
    %v692 = vunpack.c.l.b16 %v655
    %v693 = vpack.c.b16 %v678, %v677
    %v694 = vpack.c.b16 %v680, %v679
    %v695 = vpack.c.b16 %v682, %v681
    %v696 = vpack.c.b16 %v684, %v683
    %v697 = vpack.c.b16 %v686, %v685
    %v698 = vpack.c.b16 %v688, %v687
    %v699 = vpack.c.b16 %v690, %v689
    %v700 = vpack.c.b16 %v692, %v691
    %709 = vmatpush.bf16.msra.mxu0 %v700
    %710 = vmatpush.bf16.msra.mxu0 %v699
    %711 = vmatpush.bf16.msra.mxu0 %v698
    %712 = vmatpush.bf16.msra.mxu0 %v697
    %713 = vmatpush.bf16.msra.mxu0 %v696
    %714 = vmatpush.bf16.msra.mxu0 %v695
    %715 = vmatpush.bf16.msra.mxu0 %v694
    %716 = vmatpush.bf16.msra.mxu0 %v693
    %717 = vmatmul.bf16.gmra.mxu0 %v638
    %v718 = vpop.f32.mrf.mxu0
    %v719 = vadd.f32 %v659, %v718
    %v720 = vpop.f32.mrf.mxu0
    %v721 = vadd.f32 %v659, %v720
    %722 = vdwg.mxu0
    %v723 = vpack.c.bf16 %v719, %v719
    %v724 = vpack.c.bf16 %v721, %v721
    %725 = vst [vmem:[#allocation10] sm:$0xf] %v723
    %726 = vst [vmem:[#allocation10 + $0x4] sm:$0xf] %v724
    // Predicated region
    $region34: #{tpu_custom_call.1} parent=1 // pred_check
      _
    $region35: #{tpu_custom_call.1} parent=1 // pred_check_branch
      %728 = sbr.rel (0) target = $region37
    $region36: #{tpu_custom_call.1} parent=1 // pred_region
      %730 = vsyncadd [#allocation4], 0
      %s731 = sshll.u32 [#allocation10], 4
      %s732 = int_to_ptr.vmem [resolvable:$true] %s731
      %s733 = sshll.u32 %s4, 4
      %s734 = int_to_ptr.hbm [resolvable:$true] %s733
      %739 = dma.vmem_to_hbm [thread:$0]  %s732, 128, %s734, [#allocation4], 64, 64, 4
    $region37: #{tpu_custom_call.1} parent=1 // pred_fallthru
      _
    // Predicated region
    $region38: #{tpu_custom_call.1} parent=1 // pred_check
      _
    $region39: #{tpu_custom_call.1} parent=1 // pred_check_branch
      %741 = sbr.rel (0) target = $region41
    $region40: #{tpu_custom_call.1} parent=1 // pred_region
      %743 = dma.done [#allocation4], 128
    $region41: #{tpu_custom_call.1} parent=1 // pred_fallthru
      _
    %744 = vsyncpa [#allocation3], 1
    %745 = vsyncpa [#allocation6], 1
    %746 = vsyncpa [#allocation9], 1
    %747 = vsyncpa [#allocation4], 1

</llo_original>
